<compile_context>
chip_gen: v6e
topology: v6e:2x2x1
jax: 0.10.0
libtpu: 0.0.40
codegen_flags: <defaults>
</compile_context>

<pallas_src>
import functools

import jax
import jax.numpy as jnp
from jax import lax
from jax.experimental import pallas as pl
from jax.experimental.pallas import tpu as pltpu

_LANE = 128


def _tpu_defaults():
    """Return (num_cores, block_rows) tuned per TPU generation."""
    kind = ""
    try:
        kind = jax.devices()[0].device_kind.lower()
    except Exception:  # pragma: no cover - detection is best-effort only
        pass
    if "v7" in kind or "tpu7" in kind:
        return 2, 8192          # 2 TensorCores; 16 MiB pipelined f32 footprint
    if "v6" in kind or "tpu6" in kind:
        return 1, 8192
    return 1, 4096              # v5e / unknown: stay small vs. scoped VMEM


def _hybrid_l1l2_kernel(pred_ref, gt_ref, out_ref, abs_acc, sq_acc, *,
                        chunk_rows: int, num_chunks: int):
    j = pl.program_id(1)

    @pl.when(j == 0)
    def _():
        abs_acc[...] = jnp.zeros_like(abs_acc)
        sq_acc[...] = jnp.zeros_like(sq_acc)

    def accumulate(d):
        # Vreg-shaped partial sums (pure VPU adds); the cross-lane reduce
        # happens only once per core in the finalize branch.
        abs_acc[...] += jnp.sum(jnp.abs(d).reshape(-1, 8, _LANE), axis=0)
        sq_acc[...] += jnp.sum((d * d).reshape(-1, 8, _LANE), axis=0)

    if num_chunks == 1:
        accumulate(pred_ref[...].astype(jnp.float32)
                   - gt_ref[...].astype(jnp.float32))
    else:
        def body(i, carry):
            r0 = pl.multiple_of(i * chunk_rows, chunk_rows)
            d = (pred_ref[pl.ds(r0, chunk_rows), :].astype(jnp.float32)
                 - gt_ref[pl.ds(r0, chunk_rows), :].astype(jnp.float32))
            accumulate(d)
            return carry
        lax.fori_loop(0, num_chunks, body, 0, unroll=False)

    @pl.when(j == pl.num_programs(1) - 1)
    def _():
        out_ref[0, 0] = jnp.sum(abs_acc[...])
        out_ref[0, 1] = jnp.sum(sq_acc[...])


def hybrid_l1l2_ref(pred, gt, cof: float = 10.0):
    d = pred.astype(jnp.float32) - gt.astype(jnp.float32)
    return jnp.mean(jnp.abs(d)) / cof + jnp.mean(d * d)


def hybrid_l1l2(pred, gt, cof: float = 10.0, *, block_rows: int | None = None,
                num_cores: int | None = None, min_pallas_elems: int = 1 << 18):
    assert pred.shape == gt.shape, "pred/gt must have the same shape"
    n_elems = pred.size

    # Small-input fast path: fixed launch/grid overhead dominates tiny losses.
    if n_elems < max(int(min_pallas_elems), 1):
        return hybrid_l1l2_ref(pred, gt, cof)

    det_cores, det_rows = _tpu_defaults()
    if num_cores is None:
        num_cores = det_cores
    if block_rows is None:
        block_rows = det_rows

    # Sublane multiple per dtype (f32 -> 8, bf16 -> 16, int8/fp8 -> 32);
    # honor the stricter of the two inputs so both BlockSpecs are legal.
    sub = 8
    for x in (pred, gt):
        sub = max(sub, 32 // max(jnp.dtype(x.dtype).itemsize, 1))

    p_flat = jnp.ravel(pred)
    g_flat = jnp.ravel(gt)

    max_rows = n_elems // _LANE
    br = min(int(block_rows), max_rows)
    br = max(sub, (br // sub) * sub)
    tile_elems = br * _LANE

    num_tiles = n_elems // tile_elems
    if num_tiles < 2 * num_cores:
        num_cores = 1
    if num_cores > 1 and num_tiles % num_cores:
        # Push the odd tile into the JAX tail instead of masking in-kernel.
        num_tiles -= num_tiles % num_cores
    if num_tiles == 0:
        return hybrid_l1l2_ref(pred, gt, cof)

    steps_per_core = num_tiles // num_cores
    n_bulk = num_tiles * tile_elems
    n_tail = n_elems - n_bulk

    if n_elems % _LANE == 0:
        # Pure bitcast reshape: zero extra HBM traffic; the kernel simply
        # never touches the (< 1 tile per core) trailing rows.
        p2 = p_flat.reshape(max_rows, _LANE)
        g2 = g_flat.reshape(max_rows, _LANE)
    else:
        # TODO(synk): element counts not a multiple of 128 pay one bulk-sized
        # slice copy here; rare for NN tensors.
        p2 = p_flat[:n_bulk].reshape(num_tiles * br, _LANE)
        g2 = g_flat[:n_bulk].reshape(num_tiles * br, _LANE)

    # Chunked accumulation so the (rows,128) f32 difference never materializes
    # as a multi-MiB VMEM temporary.
    if br % 512 == 0:
        chunk_rows = 512
    elif br % 256 == 0:
        chunk_rows = 256
    else:
        chunk_rows = br
    num_chunks = br // chunk_rows

    def tile_map(c, j):
        return (c * steps_per_core + j, 0)

    kernel = functools.partial(
        _hybrid_l1l2_kernel,
        chunk_rows=chunk_rows,
        num_chunks=num_chunks,
    )

    itemsize = max(jnp.dtype(pred.dtype).itemsize, jnp.dtype(gt.dtype).itemsize)

    partials = pl.pallas_call(
        kernel,
        out_shape=jax.ShapeDtypeStruct((num_cores, 2), jnp.float32),
        grid_spec=pltpu.PrefetchScalarGridSpec(
            num_scalar_prefetch=0,
            grid=(num_cores, steps_per_core),
            in_specs=[
                pl.BlockSpec((br, _LANE), tile_map),
                pl.BlockSpec((br, _LANE), tile_map),
            ],
            out_specs=pl.BlockSpec((1, 2), lambda c, j: (c, 0),
                                   memory_space=pltpu.SMEM),
            scratch_shapes=[
                pltpu.VMEM((8, _LANE), jnp.float32),  # partial sum(|d|)
                pltpu.VMEM((8, _LANE), jnp.float32),  # partial sum(d^2)
            ],
        ),
        compiler_params=pltpu.CompilerParams(
            dimension_semantics=("parallel", "arbitrary"),
            vmem_limit_bytes=32 * 1024 * 1024,
        ),
        cost_estimate=pl.CostEstimate(
            flops=5 * n_bulk,
            transcendentals=0,
            bytes_accessed=2 * n_bulk * itemsize + 8 * num_cores,
        ),
    )(p2, g2)

    abs_sum = jnp.sum(partials[:, 0])
    sq_sum = jnp.sum(partials[:, 1])

    if n_tail:
        # Ragged tail (< ~2 tiles of elements): plain JAX, negligible traffic.
        td = (p_flat[n_bulk:].astype(jnp.float32)
              - g_flat[n_bulk:].astype(jnp.float32))
        abs_sum = abs_sum + jnp.sum(jnp.abs(td))
        sq_sum = sq_sum + jnp.sum(td * td)

    inv_n = 1.0 / float(n_elems)
    return abs_sum * (inv_n / float(cof)) + sq_sum * inv_n


if __name__ == "__main__":
    key = jax.random.PRNGKey(0)
    k1, k2 = jax.random.split(key)

    # NCHW, small shapes consistent with the module.
    pred = jax.random.normal(k1, (2, 4, 16, 16), dtype=jnp.float32)
    gt = jax.random.normal(k2, (2, 4, 16, 16), dtype=jnp.float32)

    # Force the Pallas path (production default would take the tiny-input
    # pure-JAX fast path at this size).
    out = hybrid_l1l2(pred, gt, cof=10.0, min_pallas_elems=0)
    out = jax.block_until_ready(out)
    ref = hybrid_l1l2_ref(pred, gt, cof=10.0)
    assert jnp.allclose(out, ref, rtol=1e-5, atol=1e-6), (out, ref)

    # Unaligned element count: exercises the kernel bulk + JAX ragged tail.
    k3, k4 = jax.random.split(k2)
    pred2 = jax.random.normal(k3, (2, 3, 17, 16), dtype=jnp.float32)
    gt2 = jax.random.normal(k4, (2, 3, 17, 16), dtype=jnp.float32)
    out2 = jax.block_until_ready(
        hybrid_l1l2(pred2, gt2, cof=10.0, min_pallas_elems=0))
    ref2 = hybrid_l1l2_ref(pred2, gt2, cof=10.0)
    assert jnp.allclose(out2, ref2, rtol=1e-5, atol=1e-6), (out2, ref2)

    print("KERNEL_OK")
</pallas_src>

<mosaic_0001>
module attributes {stable_mosaic.version = 11 : i64} {
  func.func @_hybrid_l1l2_kernel(%arg0: i32, %arg1: i32, %arg2: memref<16x128xf32, #tpu.memory_space<vmem>>, %arg3: memref<16x128xf32, #tpu.memory_space<vmem>>, %arg4: memref<1x2xf32, #tpu.memory_space<smem>>, %arg5: memref<8x128xf32, #tpu.memory_space<vmem>>, %arg6: memref<8x128xf32, #tpu.memory_space<vmem>>) attributes {dimension_semantics = [#tpu.dimension_semantics<parallel>, #tpu.dimension_semantics<arbitrary>], iteration_bounds = array<i64: 1, 1>, scalar_prefetch = 0 : i64, scratch_operands = 2 : i64, tpu.core_type = #tpu.core_type<tc>, window_params = [{transform_indices = @transform_0, window_bounds = array<i64: 16, 128>}, {transform_indices = @transform_1, window_bounds = array<i64: 16, 128>}, {transform_indices = @transform_2, window_bounds = array<i64: 1, 2>}]} {
    %c0_i32 = arith.constant 0 : i32
    %0 = arith.cmpi eq, %arg1, %c0_i32 : i32
    %1 = arith.extui %0 : i1 to i32
    %c0_i32_0 = arith.constant 0 : i32
    %2 = arith.cmpi ne, %1, %c0_i32_0 : i32
    scf.if %2 {
      %cst_15 = arith.constant 0.000000e+00 : f32
      %21 = vector.broadcast %cst_15 : f32 to vector<8x128xf32>
      %c0_16 = arith.constant 0 : index
      %c0_17 = arith.constant 0 : index
      %22 = vector.load %arg5[%c0_16, %c0_17] : memref<8x128xf32, #tpu.memory_space<vmem>>, vector<8x128xf32>
      tpu.vector_store %arg5[%c0_16, %c0_17], %21 {strides = array<i32>} : memref<8x128xf32, #tpu.memory_space<vmem>>, vector<8x128xf32>,
      %cst_18 = arith.constant 0.000000e+00 : f32
      %23 = vector.broadcast %cst_18 : f32 to vector<8x128xf32>
      %c0_19 = arith.constant 0 : index
      %c0_20 = arith.constant 0 : index
      %24 = vector.load %arg6[%c0_19, %c0_20] : memref<8x128xf32, #tpu.memory_space<vmem>>, vector<8x128xf32>
      tpu.vector_store %arg6[%c0_19, %c0_20], %23 {strides = array<i32>} : memref<8x128xf32, #tpu.memory_space<vmem>>, vector<8x128xf32>,
    } else {
    }
    %c0 = arith.constant 0 : index
    %c0_1 = arith.constant 0 : index
    %3 = vector.load %arg2[%c0, %c0_1] : memref<16x128xf32, #tpu.memory_space<vmem>>, vector<16x128xf32>
    %c0_2 = arith.constant 0 : index
    %c0_3 = arith.constant 0 : index
    %4 = vector.load %arg3[%c0_2, %c0_3] : memref<16x128xf32, #tpu.memory_space<vmem>>, vector<16x128xf32>
    %5 = arith.subf %3, %4 : vector<16x128xf32>
    %c0_4 = arith.constant 0 : index
    %c0_5 = arith.constant 0 : index
    %6 = vector.load %arg5[%c0_4, %c0_5] : memref<8x128xf32, #tpu.memory_space<vmem>>, vector<8x128xf32>
    %7 = math.absf %5 : vector<16x128xf32>
    %8 = vector.shape_cast %7 : vector<16x128xf32> to vector<2x8x128xf32>
    %cst = arith.constant dense<0.000000e+00> : vector<8x128xf32>
    %9 = vector.multi_reduction <add>, %8, %cst [0] : vector<2x8x128xf32> to vector<8x128xf32>
    %10 = arith.addf %6, %9 : vector<8x128xf32>
    %c0_6 = arith.constant 0 : index
    %c0_7 = arith.constant 0 : index
    %11 = vector.load %arg5[%c0_6, %c0_7] : memref<8x128xf32, #tpu.memory_space<vmem>>, vector<8x128xf32>
    tpu.vector_store %arg5[%c0_6, %c0_7], %10 {strides = array<i32>} : memref<8x128xf32, #tpu.memory_space<vmem>>, vector<8x128xf32>,
    %c0_8 = arith.constant 0 : index
    %c0_9 = arith.constant 0 : index
    %12 = vector.load %arg6[%c0_8, %c0_9] : memref<8x128xf32, #tpu.memory_space<vmem>>, vector<8x128xf32>
    %13 = arith.mulf %5, %5 : vector<16x128xf32>
    %14 = vector.shape_cast %13 : vector<16x128xf32> to vector<2x8x128xf32>
    %cst_10 = arith.constant dense<0.000000e+00> : vector<8x128xf32>
    %15 = vector.multi_reduction <add>, %14, %cst_10 [0] : vector<2x8x128xf32> to vector<8x128xf32>
    %16 = arith.addf %12, %15 : vector<8x128xf32>
    %c0_11 = arith.constant 0 : index
    %c0_12 = arith.constant 0 : index
    %17 = vector.load %arg6[%c0_11, %c0_12] : memref<8x128xf32, #tpu.memory_space<vmem>>, vector<8x128xf32>
    tpu.vector_store %arg6[%c0_11, %c0_12], %16 {strides = array<i32>} : memref<8x128xf32, #tpu.memory_space<vmem>>, vector<8x128xf32>,
    %c0_i32_13 = arith.constant 0 : i32
    %18 = arith.cmpi eq, %arg1, %c0_i32_13 : i32
    %19 = arith.extui %18 : i1 to i32
    %c0_i32_14 = arith.constant 0 : i32
    %20 = arith.cmpi ne, %19, %c0_i32_14 : i32
    scf.if %20 {
      %c0_15 = arith.constant 0 : index
      %c0_16 = arith.constant 0 : index
      %21 = vector.load %arg5[%c0_15, %c0_16] : memref<8x128xf32, #tpu.memory_space<vmem>>, vector<8x128xf32>
      %22 = vector.shape_cast %21 : vector<8x128xf32> to vector<1x8x128xf32>
      %cst_17 = arith.constant dense<0.000000e+00> : vector<1xf32>
      %23 = vector.multi_reduction <add>, %22, %cst_17 [1, 2] : vector<1x8x128xf32> to vector<1xf32>
      %24 = vector.shape_cast %23 : vector<1xf32> to vector<1x1x1xf32>
      %25 = vector.extract %24[0, 0, 0] : f32 from vector<1x1x1xf32>
      %c0_18 = arith.constant 0 : index
      %c0_19 = arith.constant 0 : index
      %26 = memref.load %arg4[%c0_18, %c0_19] : memref<1x2xf32, #tpu.memory_space<smem>>
      memref.store %25, %arg4[%c0_18, %c0_19] : memref<1x2xf32, #tpu.memory_space<smem>>
      %c0_20 = arith.constant 0 : index
      %c0_21 = arith.constant 0 : index
      %27 = vector.load %arg6[%c0_20, %c0_21] : memref<8x128xf32, #tpu.memory_space<vmem>>, vector<8x128xf32>
      %28 = vector.shape_cast %27 : vector<8x128xf32> to vector<1x8x128xf32>
      %cst_22 = arith.constant dense<0.000000e+00> : vector<1xf32>
      %29 = vector.multi_reduction <add>, %28, %cst_22 [1, 2] : vector<1x8x128xf32> to vector<1xf32>
      %30 = vector.shape_cast %29 : vector<1xf32> to vector<1x1x1xf32>
      %31 = vector.extract %30[0, 0, 0] : f32 from vector<1x1x1xf32>
      %c0_23 = arith.constant 0 : index
      %c1 = arith.constant 1 : index
      %32 = memref.load %arg4[%c0_23, %c1] : memref<1x2xf32, #tpu.memory_space<smem>>
      memref.store %31, %arg4[%c0_23, %c1] : memref<1x2xf32, #tpu.memory_space<smem>>
    } else {
    }
    return
  }
  func.func @transform_0(%arg0: i32, %arg1: i32) -> (i32, i32) {
    %c1_i32 = arith.constant 1 : i32
    %0 = arith.muli %arg0, %c1_i32 : i32
    %1 = arith.addi %0, %arg1 : i32
    %c0_i32 = arith.constant 0 : i32
    %c0_i32_0 = arith.constant 0 : i32
    return %1, %c0_i32 : i32, i32
  }
  func.func @transform_1(%arg0: i32, %arg1: i32) -> (i32, i32) {
    %c1_i32 = arith.constant 1 : i32
    %0 = arith.muli %arg0, %c1_i32 : i32
    %1 = arith.addi %0, %arg1 : i32
    %c0_i32 = arith.constant 0 : i32
    %c0_i32_0 = arith.constant 0 : i32
    return %1, %c0_i32 : i32, i32
  }
  func.func @transform_2(%arg0: i32, %arg1: i32) -> (i32, i32) {
    %c0_i32 = arith.constant 0 : i32
    %c0_i32_0 = arith.constant 0 : i32
    return %arg0, %c0_i32 : i32, i32
  }
}

</mosaic_0001>

<llo_original>
// kernel: tpu_custom_call.1
$region0: #{tpu_custom_call.1}
  #allocation0 [shape = 'u32[]', space=smem, size = 0x4, offset = 0x4, fixed_abs, tag = 'smem constant byte address 0x4 - core index']
  #allocation1 [shape = 'u32[144,128]{1,0:T(1,128)}', space=vmem, size = 0x12000, scoped, tag = 'internal scratch']
  #allocation2 [shape = 'f32[8,128]{1,0:T(8,128)}', space=vmem, size = 0x1000, scoped, tag = 'scratch operand']
  #allocation3 [shape = 'f32[8,128]{1,0:T(8,128)}', space=vmem, size = 0x1000, scoped, tag = 'scratch operand']
  %s0 = inlined_call_operand.hbm [shape: f32[16,128], index: 0, kind: input, shape index: {}]
  %s1 = inlined_call_operand.hbm [shape: f32[16,128], index: 1, kind: input, shape index: {}]
  %s2 = inlined_call_operand.hbm [shape: f32[1,2], index: 2, kind: output, shape index: {}]
  %s3 = sld [smem:[#allocation0]]
  $region34: #{tpu_custom_call.1} parent=0
    _
  %s5 = ssub.s32 1, %s3
  %s6 = scalar_select 0, %s5, %s3
  $region1: #{tpu_custom_call.1} parent=0
    #allocation4 [shape = 'u8[8192]{0}', space=vmem, size = 0x2000, scoped, tag = 'input window, operand 0, single buffered']
    #allocation5 [shape = 's32[1]{0}', space=sflag, size = 0x4, scoped, tag = 'scoped memory for tpu_custom_call.1']
    #allocation6 [shape = 's32[1]{0}', space=sflag, size = 0x4, scoped, tag = 'scoped memory for tpu_custom_call.1']
    #allocation7 [shape = 'u8[8192]{0}', space=vmem, size = 0x2000, scoped, tag = 'input window, operand 1, single buffered']
    #allocation8 [shape = 's32[1]{0}', space=sflag, size = 0x4, scoped, tag = 'scoped memory for tpu_custom_call.1']
    #allocation9 [shape = 'u8[512]{0}', space=smem, size = 0x200, scoped, tag = 'output window, operand 0, single buffered']
    %7 = vsyncpa [#allocation5], 0
    %8 = vsyncpa [#allocation8], 0
    %9 = vsyncpa [#allocation6], 0
    // Predicated region
    $region2: #{tpu_custom_call.1} parent=1 // pred_check
      _
    $region3: #{tpu_custom_call.1} parent=1 // pred_check_branch
      %11 = sbr.rel (0) target = $region5
    $region4: #{tpu_custom_call.1} parent=1 // pred_region
      %s12 = sadd.s32 0, 0
      %s13 = smul.u32 2, %s12
      %s15 = ssub.s32 256, 256
      %16 = vsyncadd [#allocation5], %s15
      %s17 = smul.addr %s13, 128
      %s18 = scalar_lea.hbm %s0, %s17
      %s19 = sshll.u32 [#allocation4], 4
      %s20 = int_to_ptr.vmem [resolvable:$true] %s19
      %25 = dma.hbm_to_vmem [thread:$0]  %s18, 256, %s20, [#allocation5], 128, 128, 8
    $region5: #{tpu_custom_call.1} parent=1 // pred_fallthru
      _
    // Predicated region
    $region6: #{tpu_custom_call.1} parent=1 // pred_check
      _
    $region7: #{tpu_custom_call.1} parent=1 // pred_check_branch
      %27 = sbr.rel (0) target = $region9
    $region8: #{tpu_custom_call.1} parent=1 // pred_region
      %s28 = sadd.s32 0, 0
      %s29 = smul.u32 2, %s28
      %s31 = ssub.s32 256, 256
      %32 = vsyncadd [#allocation8], %s31
      %s33 = smul.addr %s29, 128
      %s34 = scalar_lea.hbm %s1, %s33
      %s35 = sshll.u32 [#allocation7], 4
      %s36 = int_to_ptr.vmem [resolvable:$true] %s35
      %41 = dma.hbm_to_vmem [thread:$0]  %s34, 256, %s36, [#allocation8], 128, 128, 8
    $region9: #{tpu_custom_call.1} parent=1 // pred_fallthru
      _
    // Predicated region
    $region10: #{tpu_custom_call.1} parent=1 // pred_check
      _
    $region11: #{tpu_custom_call.1} parent=1 // pred_check_branch
      %43 = sbr.rel (0) target = $region13
    $region12: #{tpu_custom_call.1} parent=1 // pred_region
      %44 = dma.done [#allocation5], 256
    $region13: #{tpu_custom_call.1} parent=1 // pred_fallthru
      _
    // Predicated region
    $region14: #{tpu_custom_call.1} parent=1 // pred_check
      _
    $region15: #{tpu_custom_call.1} parent=1 // pred_check_branch
      %46 = sbr.rel (0) target = $region17
    $region16: #{tpu_custom_call.1} parent=1 // pred_region
      %47 = dma.done [#allocation8], 256
    $region17: #{tpu_custom_call.1} parent=1 // pred_fallthru
      _
    %s48 = sadd.s32 0, 0
    %s49 = smul.u32 2, %s48
    %s50 = sadd.s32 0, 0
    %s51 = smul.u32 2, %s50
    %p52 = scmp.eq.s32.totalorder 0, 0
    // Predicated region
    $region18: #{tpu_custom_call.1} parent=1 // pred_check
      %p53 = pneg %p52
    $region19: #{tpu_custom_call.1} parent=1 // pred_check_branch
      %55 = sbr.rel (%p53) target = $region21
    $region20: #{tpu_custom_call.1} parent=1 // pred_region
      %56 = vst [vmem:[#allocation2] sm:$0xff] 0.0
      %57 = vst [vmem:[#allocation3] sm:$0xff] 0.0
    $region21: #{tpu_custom_call.1} parent=1 // pred_fallthru
      _
    %v58 = vld [vmem:[#allocation4] sm:$0xff]
    %v59 = vld [vmem:[#allocation4 + $0x8] sm:$0xff]
    %v60 = vld [vmem:[#allocation7] sm:$0xff]
    %v61 = vld [vmem:[#allocation7 + $0x8] sm:$0xff]
    %v62 = vsub.f32 %v58, %v60
    %v63 = vsub.f32 %v59, %v61
    %v64 = vld [vmem:[#allocation2] sm:$0xff]
    %v65 = vand.u32 2147483647, %v62
    %v66 = vand.u32 2147483647, %v63
    %v67 = vadd.f32 %v65, %v66
    %v68 = vadd.f32 %v64, %v67
    %69 = vst [vmem:[#allocation2] sm:$0xff] %v68
    %v70 = vld [vmem:[#allocation3] sm:$0xff]
    %v71 = vmul.f32 %v62, %v62
    %v72 = vmul.f32 %v63, %v63
    %v73 = vadd.f32 %v71, %v72
    %v74 = vadd.f32 %v70, %v73
    %75 = vst [vmem:[#allocation3] sm:$0xff] %v74
    // Predicated region
    $region22: #{tpu_custom_call.1} parent=1 // pred_check
      %p76 = pneg %p52
    $region23: #{tpu_custom_call.1} parent=1 // pred_check_branch
      %78 = sbr.rel (%p76) target = $region25
    $region24: #{tpu_custom_call.1} parent=1 // pred_region
      %v79 = vld [vmem:[#allocation2] sm:$0xff]
      %80 = vadd.xlane.f32.xlu0 %v79
      %v81 = vpop.xlane.xlu0 %80
      %v82 = vrot.slane %v81, 4
      %v83 = vadd.f32 %v81, %v82
      %v84 = vrot.slane %v83, 2
      %v85 = vadd.f32 %v83, %v84
      %v86 = vrot.slane %v85, 1
      %v87 = vadd.f32 %v85, %v86
      %s88 = vtos %v87
      %s89 = scalar_lea.smem [#allocation9], 0
      %90 = sst [smem:[%s89]] %s88
      %v91 = vld [vmem:[#allocation3] sm:$0xff]
      %92 = vadd.xlane.f32.xlu0 %v91
      %v93 = vpop.xlane.xlu0 %92
      %v94 = vrot.slane %v93, 4
      %v95 = vadd.f32 %v93, %v94
      %v96 = vrot.slane %v95, 2
      %v97 = vadd.f32 %v95, %v96
      %v98 = vrot.slane %v97, 1
      %v99 = vadd.f32 %v97, %v98
      %s100 = vtos %v99
      %s101 = scalar_lea.smem [#allocation9], 1
      %102 = sst [smem:[%s101]] %s100
    $region25: #{tpu_custom_call.1} parent=1 // pred_fallthru
      _
    // Predicated region
    $region26: #{tpu_custom_call.1} parent=1 // pred_check
      _
    $region27: #{tpu_custom_call.1} parent=1 // pred_check_branch
      %104 = sbr.rel (0) target = $region29
    $region28: #{tpu_custom_call.1} parent=1 // pred_region
      %s106 = ssub.s32 16, 16
      %107 = vsyncadd [#allocation6], %s106
      %110 = dma.smem_to_hbm [#allocation9], 16, %s2, [#allocation6]
    $region29: #{tpu_custom_call.1} parent=1 // pred_fallthru
      _
    // Predicated region
    $region30: #{tpu_custom_call.1} parent=1 // pred_check
      _
    $region31: #{tpu_custom_call.1} parent=1 // pred_check_branch
      %112 = sbr.rel (0) target = $region33
    $region32: #{tpu_custom_call.1} parent=1 // pred_region
      %113 = dma.done [#allocation6], 16
    $region33: #{tpu_custom_call.1} parent=1 // pred_fallthru
      _
    %114 = sfence
    %115 = vsyncpa [#allocation5], 1
    %116 = vsyncpa [#allocation8], 1
    %117 = vsyncpa [#allocation6], 1

</llo_original>
